<compile_context>
chip_gen: v6e
topology: v6e:2x2x1
jax: 0.10.0
libtpu: 0.0.40
codegen_flags: <defaults>
</compile_context>

<pallas_src>
import functools
import math

import jax
import jax.numpy as jnp
from jax.experimental import pallas as pl
from jax.experimental.pallas import tpu as pltpu


# --------------------------------------------------------------------------------------
# Kernels
# --------------------------------------------------------------------------------------

def _head_kernel_nc(x_ref, w_ref, b_ref, o_ref, acc_ref, *, inv_hw, hw, chunk, need_mask):
    """Channel-blocked path. x block: (B, C, chunk); acc scratch: (B, C) f32."""
    k = pl.program_id(1)
    nk = pl.num_programs(1)

    @pl.when(k == 0)
    def _init():
        acc_ref[...] = jnp.zeros_like(acc_ref)

    def _accum(mask_tail):
        x = x_ref[...].astype(jnp.float32)                       # (B, C, chunk)
        if mask_tail:
            col = jax.lax.broadcasted_iota(jnp.int32, x.shape, dimension=2)
            x = jnp.where(k * chunk + col < hw, x, 0.0)
        acc_ref[...] += jnp.sum(x, axis=-1)                      # (B, C)

    if need_mask:
        # Mask only on the last (OOB-padded) spatial chunk; all other chunks stay ~2 VALU ops/element.
        @pl.when(k < nk - 1)
        def _body():
            _accum(False)

        @pl.when(k == nk - 1)
        def _tail():
            _accum(True)
    else:
        _accum(False)

    @pl.when(k == nk - 1)
    def _finalize():
        # Conv is linear => mean commutes with the 1x1 projection; bias added after the mean.
        mean_c = acc_ref[...] * jnp.float32(inv_hw)                                     # (B, C)
        pooled = jnp.dot(mean_c, w_ref[...], preferred_element_type=jnp.float32) + b_ref[...]
        # F.normalize(dim=1): x / max(||x||, eps) == x * min(rsqrt(sum(x^2)), 1/eps)
        sq = jnp.sum(pooled * pooled, axis=1, keepdims=True)
        inv_norm = jnp.minimum(jax.lax.rsqrt(sq), jnp.float32(1e12))
        o_ref[:, 0, :] = (pooled * inv_norm).astype(o_ref.dtype)


def _head_kernel_flat(x_ref, w_rows_ref, seg_ref, b_ref, o_ref, acc_ref,
                      *, inv_hw, hw, chunk, need_mask):
    """Row-flattened path for small / sublane-unaligned C.

    x block: (B*C, chunk) over the (N*C, HW) view; acc scratch: (B*C, 1) f32.
    Finalize regroups rows -> batches with a one-hot segment matmul (no in-kernel reshape).
    """
    k = pl.program_id(1)
    nk = pl.num_programs(1)

    @pl.when(k == 0)
    def _init():
        acc_ref[...] = jnp.zeros_like(acc_ref)

    def _accum(mask_tail):
        x = x_ref[...].astype(jnp.float32)                       # (R, chunk)
        if mask_tail:
            col = jax.lax.broadcasted_iota(jnp.int32, x.shape, dimension=1)
            x = jnp.where(k * chunk + col < hw, x, 0.0)
        acc_ref[...] += jnp.sum(x, axis=-1, keepdims=True)       # (R, 1)

    if need_mask:
        @pl.when(k < nk - 1)
        def _body():
            _accum(False)

        @pl.when(k == nk - 1)
        def _tail():
            _accum(True)
    else:
        _accum(False)

    @pl.when(k == nk - 1)
    def _finalize():
        mean_rows = acc_ref[...] * jnp.float32(inv_hw)           # (R, 1), row r = (batch r//C, chan r%C)
        prod = mean_rows * w_rows_ref[...]                       # (R, 3)   w_rows[r] = w[r % C]
        pooled = jnp.dot(seg_ref[...], prod,                     # (B, R) @ (R, 3) -> (B, 3)
                         preferred_element_type=jnp.float32) + b_ref[...]
        sq = jnp.sum(pooled * pooled, axis=1, keepdims=True)
        inv_norm = jnp.minimum(jax.lax.rsqrt(sq), jnp.float32(1e12))
        o_ref[:, 0, :] = (pooled * inv_norm).astype(o_ref.dtype)


# --------------------------------------------------------------------------------------
# Tiling / chip heuristics
# --------------------------------------------------------------------------------------

def _chip_params():
    """(per-input-block byte budget, prefer >=2 batch tiles on the parallel axis)."""
    kind = ""
    try:
        kind = jax.devices()[0].device_kind.lower()
    except Exception:
        pass
    if "v7" in kind:
        return 12 << 20, True          # 3.2 TB/s: big blocks amortize 0.35us/step; 2 TCs to feed
    if "v6" in kind or "trillium" in kind:
        return 10 << 20, False
    if "v5 lite" in kind or "v5e" in kind or "v5lite" in kind:
        return 6 << 20, False
    return 8 << 20, False


def _divisors(n):
    out = set()
    for i in range(1, int(math.isqrt(n)) + 1):
        if n % i == 0:
            out.add(i)
            out.add(n // i)
    return sorted(out)


def _pick_b(N, rows_per_b, HW, itemsize, budget, prefer_two, valid):
    """Largest valid divisor of N whose block (B*rows_per_b, >= min(HW,512)) fits the byte budget."""
    target_chunk = min(HW, 512)
    divs = [d for d in _divisors(N) if valid(d)]
    if not divs:
        return None
    fits = [d for d in divs if d * rows_per_b * target_chunk * itemsize <= budget]
    pool = fits if fits else divs
    if prefer_two and N >= 2:
        two = [d for d in pool if N // d >= 2]
        if two:
            pool = two
    return max(pool) if fits else min(pool)


def _pick_chunk(rows, HW, itemsize, budget):
    """Largest lane-aligned spatial chunk such that rows*chunk*itemsize <= budget (full HW if it fits)."""
    if rows * HW * itemsize <= budget or HW <= 128:
        return HW
    chunk = (budget // (rows * itemsize)) // 128 * 128
    chunk = max(128, chunk)
    return HW if chunk >= HW else chunk


def _pad(n, m):
    return ((n + m - 1) // m) * m


# --------------------------------------------------------------------------------------
# Wrapper
# --------------------------------------------------------------------------------------

def average_pooling_head(x_nchw, conv_weight, conv_bias):
    """x_nchw: (N, C, H, W); conv_weight: (3, C, 1, 1); conv_bias: (3,) -> (N, 3) f32."""
    N, C, H, W = x_nchw.shape
    HW = H * W
    itemsize = jnp.dtype(x_nchw.dtype).itemsize
    packing = 8 * max(1, 4 // itemsize)            # sublane packing: 8 f32, 16 bf16, 32 int8

    budget, prefer_two = _chip_params()

    w = jnp.transpose(conv_weight.reshape(3, C), (1, 0)).astype(jnp.float32)   # (C, 3)
    b = conv_bias.reshape(1, 3).astype(jnp.float32)                            # (1, 3)

    # ---- layout choice: row-flattened for small / unaligned C, channel-blocked otherwise ----
    use_flat = (C % packing != 0) and C <= 64
    B = None
    if use_flat:
        def _valid_flat(d):
            rows = d * C
            return (rows % packing == 0 or d == N) and rows <= 2048 and d <= 256
        B = _pick_b(N, C, HW, itemsize, budget, prefer_two, _valid_flat)
        if B is None:
            use_flat = False
    if not use_flat:
        B = _pick_b(N, C, HW, itemsize, budget, prefer_two, lambda d: True)

    rows = B * C
    chunk = _pick_chunk(rows, HW, itemsize, budget)
    n_k = pl.cdiv(HW, chunk)
    need_mask = (chunk < HW) and (HW % chunk != 0)

    kern_kwargs = dict(inv_hw=1.0 / HW, hw=HW, chunk=chunk, need_mask=need_mask)

    cost = pl.CostEstimate(
        flops=int(N * C * HW + 2 * N * C * 3 + 6 * N),
        transcendentals=int(N),
        bytes_accessed=int(N * C * HW * itemsize + C * 3 * 4 + N * 3 * 4),
    )

    if use_flat:
        x_flat = x_nchw.reshape(N * C, HW)                       # free, contiguous
        w_rows = jnp.tile(w, (B, 1))                             # (B*C, 3): w_rows[r] = w[r % C]
        seg = (jnp.arange(B)[:, None] ==
               (jnp.arange(rows)[None, :] // C)).astype(jnp.float32)   # (B, B*C) one-hot rows->batch

        block_vmem = _pad(rows, packing) * _pad(chunk, 128) * itemsize
        aux_vmem = (_pad(rows, 8) * 128 * 4                      # acc (rows,1) f32 scratch
                    + 2 * _pad(rows, 8) * 128 * 4                # w_rows blocks
                    + 2 * _pad(B, 8) * _pad(rows, 128) * 4)      # seg blocks
        vmem_limit = int(min(56 << 20, max(32 << 20, 2 * block_vmem + aux_vmem + (4 << 20))))

        out = pl.pallas_call(
            functools.partial(_head_kernel_flat, **kern_kwargs),
            out_shape=jax.ShapeDtypeStruct((N, 1, 3), jnp.float32),
            grid_spec=pltpu.PrefetchScalarGridSpec(
                num_scalar_prefetch=0,
                grid=(N // B, n_k),                              # batch tiles x spatial chunks (reduction last)
                in_specs=[
                    pl.BlockSpec((rows, chunk), lambda bi, ki: (bi, ki)),
                    pl.BlockSpec((rows, 3), lambda bi, ki: (0, 0)),
                    pl.BlockSpec((B, rows), lambda bi, ki: (0, 0)),
                    pl.BlockSpec((1, 3), lambda bi, ki: (0, 0)),
                ],
                out_specs=pl.BlockSpec((B, 1, 3), lambda bi, ki: (bi, 0, 0)),
                scratch_shapes=[pltpu.VMEM((rows, 1), jnp.float32)],
            ),
            compiler_params=pltpu.CompilerParams(
                dimension_semantics=("parallel", "arbitrary"),
                vmem_limit_bytes=vmem_limit,
            ),
            cost_estimate=cost,
        )(x_flat, w_rows, seg, b)
    else:
        x3 = x_nchw.reshape(N, C, HW)                            # free, contiguous; no HBM transpose

        block_vmem = B * _pad(C, packing) * _pad(chunk, 128) * itemsize
        aux_vmem = (_pad(B, 8) * _pad(C, 128) * 4                # acc (B, C) f32 scratch
                    + 2 * _pad(C, 8) * 128 * 4)                  # weight blocks
        vmem_limit = int(min(56 << 20, max(32 << 20, 2 * block_vmem + aux_vmem + (4 << 20))))

        out = pl.pallas_call(
            functools.partial(_head_kernel_nc, **kern_kwargs),
            out_shape=jax.ShapeDtypeStruct((N, 1, 3), jnp.float32),
            grid_spec=pltpu.PrefetchScalarGridSpec(
                num_scalar_prefetch=0,
                grid=(N // B, n_k),
                in_specs=[
                    pl.BlockSpec((B, C, chunk), lambda bi, ki: (bi, 0, ki)),
                    pl.BlockSpec((C, 3), lambda bi, ki: (0, 0)),
                    pl.BlockSpec((1, 3), lambda bi, ki: (0, 0)),
                ],
                out_specs=pl.BlockSpec((B, 1, 3), lambda bi, ki: (bi, 0, 0)),
                scratch_shapes=[pltpu.VMEM((B, C), jnp.float32)],
            ),
            compiler_params=pltpu.CompilerParams(
                dimension_semantics=("parallel", "arbitrary"),
                vmem_limit_bytes=vmem_limit,
            ),
            cost_estimate=cost,
        )(x3, w, b)

    return out.reshape(N, 3)


# --------------------------------------------------------------------------------------
# Pure-JAX reference (torch forward, eval mode)
# --------------------------------------------------------------------------------------

def reference(x_nchw, conv_weight, conv_bias):
    N, C, H, W = x_nchw.shape
    w = conv_weight.reshape(3, C)
    y = jnp.einsum("nchw,oc->nohw", x_nchw.astype(jnp.float32), w.astype(jnp.float32))
    y = y + conv_bias[None, :, None, None].astype(jnp.float32)
    pooled = jnp.mean(y, axis=(2, 3))                            # (N, 3)
    norm = jnp.sqrt(jnp.sum(pooled * pooled, axis=1, keepdims=True))
    return pooled / jnp.maximum(norm, 1e-12)


if __name__ == "__main__":
    key = jax.random.PRNGKey(0)
    k_x, k_w, k_b = jax.random.split(key, 3)

    N, C, H, W = 2, 4, 16, 16
    x = jax.random.normal(k_x, (N, C, H, W), dtype=jnp.float32)
    conv_weight = jax.random.normal(k_w, (3, C, 1, 1), dtype=jnp.float32) * 0.1
    conv_bias = jax.random.normal(k_b, (3,), dtype=jnp.float32) * 0.1

    out = average_pooling_head(x, conv_weight, conv_bias)
    out = jax.block_until_ready(out)

    ref = reference(x, conv_weight, conv_bias)
    assert out.shape == (N, 3)
    assert jnp.allclose(out, ref, atol=1e-5, rtol=1e-5)

    print("KERNEL_OK")
</pallas_src>

<mosaic_0001>
module attributes {stable_mosaic.version = 11 : i64} {
  func.func @_head_kernel_flat(%arg0: i32, %arg1: i32, %arg2: memref<8x256xf32, #tpu.memory_space<vmem>>, %arg3: memref<8x3xf32, #tpu.memory_space<vmem>>, %arg4: memref<2x8xf32, #tpu.memory_space<vmem>>, %arg5: memref<1x3xf32, #tpu.memory_space<vmem>>, %arg6: memref<2x1x3xf32, #tpu.memory_space<vmem>>, %arg7: memref<8x1xf32, #tpu.memory_space<vmem>>) attributes {dimension_semantics = [#tpu.dimension_semantics<parallel>, #tpu.dimension_semantics<arbitrary>], iteration_bounds = array<i64: 1, 1>, scalar_prefetch = 0 : i64, scratch_operands = 1 : i64, tpu.core_type = #tpu.core_type<tc>, window_params = [{transform_indices = @transform_0, window_bounds = array<i64: 8, 256>}, {pipeline_mode = #tpu.pipeline_mode<synchronous>, transform_indices = @transform_1, window_bounds = array<i64: 8, 3>}, {pipeline_mode = #tpu.pipeline_mode<synchronous>, transform_indices = @transform_2, window_bounds = array<i64: 2, 8>}, {pipeline_mode = #tpu.pipeline_mode<synchronous>, transform_indices = @transform_3, window_bounds = array<i64: 1, 3>}, {transform_indices = @transform_4, window_bounds = array<i64: 2, 1, 3>}]} {
    %c0_i32 = arith.constant 0 : i32
    %0 = arith.cmpi eq, %arg1, %c0_i32 : i32
    %1 = arith.extui %0 : i1 to i32
    %c0_i32_0 = arith.constant 0 : i32
    %2 = arith.cmpi ne, %1, %c0_i32_0 : i32
    scf.if %2 {
      %cst_8 = arith.constant 0.000000e+00 : f32
      %12 = vector.broadcast %cst_8 : f32 to vector<8x1xf32>
      %c0_9 = arith.constant 0 : index
      %c0_10 = arith.constant 0 : index
      %13 = vector.load %arg7[%c0_9, %c0_10] : memref<8x1xf32, #tpu.memory_space<vmem>>, vector<8x1xf32>
      tpu.vector_store %arg7[%c0_9, %c0_10], %12 {strides = array<i32>} : memref<8x1xf32, #tpu.memory_space<vmem>>, vector<8x1xf32>,
    } else {
    }
    %c0 = arith.constant 0 : index
    %c0_1 = arith.constant 0 : index
    %3 = vector.load %arg2[%c0, %c0_1] : memref<8x256xf32, #tpu.memory_space<vmem>>, vector<8x256xf32>
    %c0_2 = arith.constant 0 : index
    %c0_3 = arith.constant 0 : index
    %4 = vector.load %arg7[%c0_2, %c0_3] : memref<8x1xf32, #tpu.memory_space<vmem>>, vector<8x1xf32>
    %cst = arith.constant dense<0.000000e+00> : vector<8xf32>
    %5 = vector.multi_reduction <add>, %3, %cst [1] : vector<8x256xf32> to vector<8xf32>
    %6 = vector.shape_cast %5 : vector<8xf32> to vector<8x1xf32>
    %7 = arith.addf %4, %6 : vector<8x1xf32>
    %c0_4 = arith.constant 0 : index
    %c0_5 = arith.constant 0 : index
    %8 = vector.load %arg7[%c0_4, %c0_5] : memref<8x1xf32, #tpu.memory_space<vmem>>, vector<8x1xf32>
    tpu.vector_store %arg7[%c0_4, %c0_5], %7 {strides = array<i32>} : memref<8x1xf32, #tpu.memory_space<vmem>>, vector<8x1xf32>,
    %c0_i32_6 = arith.constant 0 : i32
    %9 = arith.cmpi eq, %arg1, %c0_i32_6 : i32
    %10 = arith.extui %9 : i1 to i32
    %c0_i32_7 = arith.constant 0 : i32
    %11 = arith.cmpi ne, %10, %c0_i32_7 : i32
    scf.if %11 {
      %c0_8 = arith.constant 0 : index
      %c0_9 = arith.constant 0 : index
      %12 = vector.load %arg7[%c0_8, %c0_9] : memref<8x1xf32, #tpu.memory_space<vmem>>, vector<8x1xf32>
      %cst_10 = arith.constant 3.906250e-03 : f32
      %13 = vector.broadcast %cst_10 : f32 to vector<8x1xf32>
      %14 = arith.mulf %12, %13 : vector<8x1xf32>
      %c0_11 = arith.constant 0 : index
      %c0_12 = arith.constant 0 : index
      %15 = vector.load %arg3[%c0_11, %c0_12] : memref<8x3xf32, #tpu.memory_space<vmem>>, vector<8x3xf32>
      %16 = vector.broadcast %14 : vector<8x1xf32> to vector<8x3xf32>
      %17 = arith.mulf %16, %15 : vector<8x3xf32>
      %c0_13 = arith.constant 0 : index
      %c0_14 = arith.constant 0 : index
      %18 = vector.load %arg4[%c0_13, %c0_14] : memref<2x8xf32, #tpu.memory_space<vmem>>, vector<2x8xf32>
      %cst_15 = arith.constant dense<0.000000e+00> : vector<2x3xf32>
      %19 = tpu.matmul %18, %17, %cst_15 {dimension_numbers = #tpu.dot_dimension_numbers<[1], [0], [0], [1], [0, 0, 1, 1], [], []>} : vector<2x8xf32>, vector<8x3xf32>, vector<2x3xf32> -> vector<2x3xf32>
      %c0_16 = arith.constant 0 : index
      %c0_17 = arith.constant 0 : index
      %20 = vector.load %arg5[%c0_16, %c0_17] : memref<1x3xf32, #tpu.memory_space<vmem>>, vector<1x3xf32>
      %21 = vector.broadcast %20 : vector<1x3xf32> to vector<2x3xf32>
      %22 = arith.addf %19, %21 : vector<2x3xf32>
      %23 = arith.mulf %22, %22 : vector<2x3xf32>
      %cst_18 = arith.constant dense<0.000000e+00> : vector<2xf32>
      %24 = vector.multi_reduction <add>, %23, %cst_18 [1] : vector<2x3xf32> to vector<2xf32>
      %25 = vector.shape_cast %24 : vector<2xf32> to vector<2x1xf32>
      %26 = math.rsqrt %25 : vector<2x1xf32>
      %cst_19 = arith.constant 9.99999995E+11 : f32
      %27 = vector.broadcast %cst_19 : f32 to vector<2x1xf32>
      %28 = arith.minimumf %26, %27 : vector<2x1xf32>
      %29 = vector.broadcast %28 : vector<2x1xf32> to vector<2x3xf32>
      %30 = arith.mulf %22, %29 : vector<2x3xf32>
      %c0_20 = arith.constant 0 : index
      %c0_21 = arith.constant 0 : index
      %c0_22 = arith.constant 0 : index
      %31 = vector.load %arg6[%c0_20, %c0_21, %c0_22] : memref<2x1x3xf32, #tpu.memory_space<vmem>>, vector<2x1x3xf32>
      %32 = vector.shape_cast %31 : vector<2x1x3xf32> to vector<2x3xf32>
      %33 = vector.shape_cast %30 : vector<2x3xf32> to vector<2x1x3xf32>
      tpu.vector_store %arg6[%c0_20, %c0_21, %c0_22], %33 {strides = array<i32>} : memref<2x1x3xf32, #tpu.memory_space<vmem>>, vector<2x1x3xf32>,
    } else {
    }
    return
  }
  func.func @transform_0(%arg0: i32, %arg1: i32) -> (i32, i32) {
    %c0_i32 = arith.constant 0 : i32
    return %arg0, %arg1 : i32, i32
  }
  func.func @transform_1(%arg0: i32, %arg1: i32) -> (i32, i32) {
    %c0_i32 = arith.constant 0 : i32
    %c0_i32_0 = arith.constant 0 : i32
    %c0_i32_1 = arith.constant 0 : i32
    return %c0_i32, %c0_i32_0 : i32, i32
  }
  func.func @transform_2(%arg0: i32, %arg1: i32) -> (i32, i32) {
    %c0_i32 = arith.constant 0 : i32
    %c0_i32_0 = arith.constant 0 : i32
    %c0_i32_1 = arith.constant 0 : i32
    return %c0_i32, %c0_i32_0 : i32, i32
  }
  func.func @transform_3(%arg0: i32, %arg1: i32) -> (i32, i32) {
    %c0_i32 = arith.constant 0 : i32
    %c0_i32_0 = arith.constant 0 : i32
    %c0_i32_1 = arith.constant 0 : i32
    return %c0_i32, %c0_i32_0 : i32, i32
  }
  func.func @transform_4(%arg0: i32, %arg1: i32) -> (i32, i32, i32) {
    %c0_i32 = arith.constant 0 : i32
    %c0_i32_0 = arith.constant 0 : i32
    %c0_i32_1 = arith.constant 0 : i32
    return %arg0, %c0_i32, %c0_i32_0 : i32, i32, i32
  }
}

</mosaic_0001>

<llo_original>
// kernel: tpu_custom_call.1
$region0: #{tpu_custom_call.1}
  #allocation0 [shape = 'u32[]', space=smem, size = 0x4, offset = 0x4, fixed_abs, tag = 'smem constant byte address 0x4 - core index']
  #allocation1 [shape = 'u32[144,128]{1,0:T(1,128)}', space=vmem, size = 0x12000, scoped, tag = 'internal scratch']
  #allocation2 [shape = 'f32[8,1]{1,0:T(8,128)}', space=vmem, size = 0x1000, scoped, tag = 'scratch operand']
  %s0 = inlined_call_operand.hbm [shape: f32[8,256], index: 0, kind: input, shape index: {}]
  %s1 = inlined_call_operand.vmem [shape: f32[8,3], index: 1, kind: input, shape index: {}]
  %s2 = inlined_call_operand.vmem [shape: f32[2,8], index: 2, kind: input, shape index: {}]
  %s3 = inlined_call_operand.vmem [shape: f32[1,3], index: 3, kind: input, shape index: {}]
  %s4 = inlined_call_operand.hbm [shape: f32[2,1,3], index: 4, kind: output, shape index: {}]
  %s5 = sld [smem:[#allocation0]]
  $region38: #{tpu_custom_call.1} parent=0
    _
  %s7 = ssub.s32 1, %s5
  %s8 = scalar_select 0, %s7, %s5
  $region1: #{tpu_custom_call.1} parent=0
    #allocation3 [shape = 'u8[8192]{0}', space=vmem, size = 0x2000, scoped, tag = 'input window, operand 0, single buffered']
    #allocation4 [shape = 's32[1]{0}', space=sflag, size = 0x4, scoped, tag = 'scoped memory for tpu_custom_call.1']
    #allocation5 [shape = 's32[1]{0}', space=sflag, size = 0x4, scoped, tag = 'scoped memory for tpu_custom_call.1']
    #allocation6 [shape = 'u8[1024]{0}', space=vmem, size = 0x400, scoped, tag = 'output window, operand 0, single buffered']
    %9 = vsyncpa [#allocation4], 0
    %10 = vsyncpa [#allocation5], 0
    // Predicated region
    $region2: #{tpu_custom_call.1} parent=1 // pred_check
      _
    $region3: #{tpu_custom_call.1} parent=1 // pred_check_branch
      %12 = sbr.rel (0) target = $region5
    $region4: #{tpu_custom_call.1} parent=1 // pred_region
      %s14 = ssub.s32 256, 256
      %15 = vsyncadd [#allocation4], %s14
      %s17 = sshll.u32 [#allocation3], 4
      %s18 = int_to_ptr.vmem [resolvable:$true] %s17
      %20 = dma.hbm_to_vmem [thread:$0]  %s0, 256, %s18, [#allocation4]
    $region5: #{tpu_custom_call.1} parent=1 // pred_fallthru
      _
    // Predicated region
    $region6: #{tpu_custom_call.1} parent=1 // pred_check
      _
    $region7: #{tpu_custom_call.1} parent=1 // pred_check_branch
      %22 = sbr.rel (0) target = $region9
    $region8: #{tpu_custom_call.1} parent=1 // pred_region
      _
    $region9: #{tpu_custom_call.1} parent=1 // pred_fallthru
      _
    // Predicated region
    $region10: #{tpu_custom_call.1} parent=1 // pred_check
      _
    $region11: #{tpu_custom_call.1} parent=1 // pred_check_branch
      %24 = sbr.rel (0) target = $region13
    $region12: #{tpu_custom_call.1} parent=1 // pred_region
      _
    $region13: #{tpu_custom_call.1} parent=1 // pred_fallthru
      _
    // Predicated region
    $region14: #{tpu_custom_call.1} parent=1 // pred_check
      _
    $region15: #{tpu_custom_call.1} parent=1 // pred_check_branch
      %26 = sbr.rel (0) target = $region17
    $region16: #{tpu_custom_call.1} parent=1 // pred_region
      _
    $region17: #{tpu_custom_call.1} parent=1 // pred_fallthru
      _
    // Predicated region
    $region18: #{tpu_custom_call.1} parent=1 // pred_check
      _
    $region19: #{tpu_custom_call.1} parent=1 // pred_check_branch
      %28 = sbr.rel (0) target = $region21
    $region20: #{tpu_custom_call.1} parent=1 // pred_region
      %29 = dma.done [#allocation4], 256
    $region21: #{tpu_custom_call.1} parent=1 // pred_fallthru
      _
    %p30 = scmp.eq.s32.totalorder 0, 0
    // Predicated region
    $region22: #{tpu_custom_call.1} parent=1 // pred_check
      %p31 = pneg %p30
    $region23: #{tpu_custom_call.1} parent=1 // pred_check_branch
      %33 = sbr.rel (%p31) target = $region25
    $region24: #{tpu_custom_call.1} parent=1 // pred_region
      %vm34 = vcmask 7168
      %35 = vst.msk [vmem:[#allocation2] sm:$0xff] %vm34, 0.0
    $region25: #{tpu_custom_call.1} parent=1 // pred_fallthru
      _
    %v36 = vld [vmem:[#allocation3] sm:$0xff]
    %v37 = vld [vmem:[#allocation3 + $0x8] sm:$0xff]
    %v38 = vld [vmem:[#allocation2] sm:$0xff]
    %v39 = vadd.f32 %v36, %v37
    %40 = vadd.xlane.f32.xlu0 %v39
    %v41 = vpop.xlane.xlu0 %40
    %v42 = vadd.f32 %v38, %v41
    %vm43 = vcmask 7168
    %44 = vst.msk [vmem:[#allocation2] sm:$0xff] %vm43, %v42
    // Predicated region
    $region26: #{tpu_custom_call.1} parent=1 // pred_check
      %p45 = pneg %p30
    $region27: #{tpu_custom_call.1} parent=1 // pred_check_branch
      %47 = sbr.rel (%p45) target = $region29
    $region28: #{tpu_custom_call.1} parent=1 // pred_region
      %v48 = vld [vmem:[#allocation2] sm:$0xff]
      %v49 = vmul.f32 %v48, 0.00390625
      %v50 = vld [vmem:[%s1] sm:$0xff]
      %52 = vset.pattern.permute.xlu0 0
      %53 = vperm.xlu0 %52, %v49
      %v54 = vpop.permute.xlu0 %53
      %v56 = vmul.f32 %v54, %v50
      %v57 = vld [vmem:[%s2] sm:$0x3]
      %v58 = vld [vmem:[%s3] sm:$0x1]
      %v60 = vlaneseq
      %v61 = vshrl.u32 %v60, 7
      %v62 = vsub.s32 0, %v61
      %v63 = vrot.slane %v58, %v62
      %vm65 = vcmask 64512
      %v67 = vsel %vm65, %v57, 0
      %69 = vmatprep.subr.mxu0 0.0
      %70 = vmatpush1.msra.mxu0 0.0
      %71 = vmatprep.subr.mxu0 0.0
      %72 = vmatpush1.msra.mxu0 0.0
      %73 = vmatprep.subr.mxu0 0.0
      %74 = vmatpush1.msra.mxu0 0.0
      %75 = vmatprep.subr.mxu0 0.0
      %76 = vmatpush1.msra.mxu0 0.0
      %77 = vmatprep.subr.mxu0 0.0
      %78 = vmatpush1.msra.mxu0 0.0
      %79 = vmatprep.subr.mxu0 0.0
      %80 = vmatpush1.msra.mxu0 0.0
      %81 = vmatprep.subr.mxu0 0.0
      %82 = vmatpush1.msra.mxu0 0.0
      %83 = vmatprep.subr.mxu0 0.0
      %84 = vmatpush1.msra.mxu0 0.0
      %85 = vmatprep.subr.mxu0 0.0
      %86 = vmatpush1.msra.mxu0 0.0
      %87 = vmatprep.subr.mxu0 0.0
      %88 = vmatpush1.msra.mxu0 0.0
      %89 = vmatprep.subr.mxu0 0.0
      %90 = vmatpush1.msra.mxu0 0.0
      %91 = vmatprep.subr.mxu0 0.0
      %92 = vmatpush1.msra.mxu0 0.0
      %93 = vmatprep.subr.mxu0 0.0
      %94 = vmatpush1.msra.mxu0 0.0
      %95 = vmatprep.subr.mxu0 0.0
      %96 = vmatpush1.msra.mxu0 0.0
      %97 = vmatprep.subr.mxu0 0.0
      %98 = vmatpush1.msra.mxu0 0.0
      %99 = vmatprep.subr.mxu0 0.0
      %100 = vmatpush1.msra.mxu0 %v56
      %101 = vmatprep.subr.mxu0 0.0
      %102 = vmatpush2.msra.mxu0 0.0
      %103 = vmatprep.subr.mxu0 0.0
      %104 = vmatpush2.msra.mxu0 0.0
      %105 = vmatprep.subr.mxu0 0.0
      %106 = vmatpush2.msra.mxu0 0.0
      %107 = vmatprep.subr.mxu0 0.0
      %108 = vmatpush2.msra.mxu0 0.0
      %109 = vmatprep.subr.mxu0 0.0
      %110 = vmatpush2.msra.mxu0 0.0
      %111 = vmatprep.subr.mxu0 0.0
      %112 = vmatpush2.msra.mxu0 0.0
      %113 = vmatprep.subr.mxu0 0.0
      %114 = vmatpush2.msra.mxu0 0.0
      %115 = vmatprep.subr.mxu0 0.0
      %116 = vmatpush2.msra.mxu0 0.0
      %117 = vmatprep.subr.mxu0 0.0
      %118 = vmatpush2.msra.mxu0 0.0
      %119 = vmatprep.subr.mxu0 0.0
      %120 = vmatpush2.msra.mxu0 0.0
      %121 = vmatprep.subr.mxu0 0.0
      %122 = vmatpush2.msra.mxu0 0.0
      %123 = vmatprep.subr.mxu0 0.0
      %124 = vmatpush2.msra.mxu0 0.0
      %125 = vmatprep.subr.mxu0 0.0
      %126 = vmatpush2.msra.mxu0 0.0
      %127 = vmatprep.subr.mxu0 0.0
      %128 = vmatpush2.msra.mxu0 0.0
      %129 = vmatprep.subr.mxu0 0.0
      %130 = vmatpush2.msra.mxu0 0.0
      %131 = vmatprep.subr.mxu0 0.0
      %132 = vmatpush2.msra.mxu0 0.0
      %133 = vmatprep.mubr.f32.mxu0 0.0
      %134 = vmatmul.mubr.f32.gmra.mxu0 %v67
      %v135 = vpop.f32.mrf.mxu0
      %v136 = vadd.f32 %v63, %v135
      %v137 = vpop.f32.mrf.mxu0
      %138 = vdwg.mxu0
      %v139 = vmul.f32 %v136, %v136
      %vm140 = vcmask 17408
      %v141 = vsel %vm140, %v139, 0.0
      %142 = vadd.xlane.f32.xlu0 %v141
      %v143 = vpop.xlane.xlu0 %142
      %v144 = vrsqrt.pop %v143
      %v145 = vmin.f32 %v144, 1e+12
      %v146 = vmul.f32 %v136, %v145
      %v149 = vunpack.c.l.s4 1966171168
      %v150 = vunpack.c.0.s8 %v149
      %v151 = vlaneseq
      %v152 = vshrl.u32 %v151, 7
      %v153 = vsub.s32 %v150, %v152
      %v154 = vrot.slane %v146, %v153
      %v155 = vcombine.high %v154, %v154
      %v157 = vunpack.c.l.s4 1966171168
      %v158 = vunpack.c.0.s8 %v157
      %v159 = vlaneseq
      %v160 = vshrl.u32 %v159, 7
      %v161 = vsub.s32 %v158, %v160
      %v162 = vrot.slane %v154, %v161
      %v164 = vunpack.c.l.s4 1966171168
      %v165 = vunpack.c.0.s8 %v164
      %v166 = vlaneseq
      %v167 = vshrl.u32 %v166, 7
      %v168 = vsub.s32 %v165, %v167
      %v169 = vrot.slane %v155, %v168
      %vm172 = vcmask 16384
      %173 = vst.msk [vmem:[#allocation6] sm:$0x1] %vm172, %v162
      %174 = vst.msk [vmem:[#allocation6 + $0x1] sm:$0x1] %vm172, %v169
    $region29: #{tpu_custom_call.1} parent=1 // pred_fallthru
      _
    // Predicated region
    $region30: #{tpu_custom_call.1} parent=1 // pred_check
      _
    $region31: #{tpu_custom_call.1} parent=1 // pred_check_branch
      %176 = sbr.rel (0) target = $region33
    $region32: #{tpu_custom_call.1} parent=1 // pred_region
      %s178 = ssub.s32 32, 32
      %179 = vsyncadd [#allocation5], %s178
      %s180 = sshll.u32 [#allocation6], 4
      %s181 = int_to_ptr.vmem [resolvable:$true] %s180
      %186 = dma.vmem_to_hbm [thread:$0]  %s181, 32, %s4, [#allocation5], 16, 16, 1
    $region33: #{tpu_custom_call.1} parent=1 // pred_fallthru
      _
    // Predicated region
    $region34: #{tpu_custom_call.1} parent=1 // pred_check
      _
    $region35: #{tpu_custom_call.1} parent=1 // pred_check_branch
      %188 = sbr.rel (0) target = $region37
    $region36: #{tpu_custom_call.1} parent=1 // pred_region
      %189 = dma.done [#allocation5], 32
    $region37: #{tpu_custom_call.1} parent=1 // pred_fallthru
      _
    %190 = vsyncpa [#allocation4], 1
    %191 = vsyncpa [#allocation5], 1

</llo_original>
